<compile_context>
chip_gen: v7x
topology: tpu7x:2x2x1
jax: 0.10.0
libtpu: 0.0.40
codegen_flags: <defaults>
</compile_context>

<pallas_src>
import functools

import numpy as np
import jax
import jax.numpy as jnp
from jax.experimental import pallas as pl
from jax.experimental.pallas import tpu as pltpu

_LANE = 128


def _round_up(x, m):
    return ((x + m - 1) // m) * m


# ---------------------------------------------------------------------------
# Fused Pallas kernel: the entire decoder for one batch tile.
# ---------------------------------------------------------------------------
def _make_fused_kernel(n_layers, split_dims):
    """split_dims[i] = padded width of layer i's (filter|gate) half (mult of 128)."""

    def kernel(x_ref, *refs):
        # refs = (W0, b0, W1, b1, ..., W_{n-1}, b_{n-1}, W_final, b_final, o_ref)
        o_ref = refs[-1]
        h = x_ref[0].astype(jnp.float32)            # (TB, D_in): batch = MXU M dim
        for i in range(n_layers):
            w = refs[2 * i][...]                    # (D_in_pad, 2*D_pad)  filter||gate
            b = refs[2 * i + 1][...]                # (1, 2*D_pad)
            z = jnp.dot(h, w, preferred_element_type=jnp.float32) + b
            d = split_dims[i]                       # multiple of 128 -> aligned split
            h = jnp.tanh(z[:, :d]) * jax.nn.sigmoid(z[:, d:])
        wf = refs[2 * n_layers][...]                # (D_in_pad, D_fin_pad)
        bf = refs[2 * n_layers + 1][...]            # (1, D_fin_pad)
        out = jnp.dot(h, wf, preferred_element_type=jnp.float32) + bf
        o_ref[0] = out.astype(o_ref.dtype)

    return kernel


# ---------------------------------------------------------------------------
# Weight preparation: fold upsample + conv3(pad=1) into dense matrices (wrapper).
# ---------------------------------------------------------------------------
def _conv3_as_dense(w, b, lin, lout, src_idx):
    """Nearest interp (src_idx) + conv1d(k=3, pad=1), as a dense map on flattened axes.

    w: (3, cin, cout) tap-major channels-last, b: (cout,), src_idx: (lout,) ints.
    Returns M (lin*cin, lout*cout), bias (lout*cout,) with flattening d = pos*ch + c.
    """
    _, cin, cout = w.shape
    t = np.arange(lout)
    sel = np.zeros((3, lin, lout), np.float32)
    for k in range(3):
        p = t + k - 1                               # padded position read by tap k
        valid = (p >= 0) & (p < lout)               # zero padding outside
        j = np.asarray(src_idx)[np.clip(p, 0, lout - 1)]
        sel[k, j[valid], t[valid]] = 1.0
    m = jnp.einsum("kjt,kco->jcto", jnp.asarray(sel), w).reshape(lin * cin, lout * cout)
    bias = jnp.tile(jnp.reshape(b, (1, cout)), (lout, 1)).reshape(lout * cout)
    return m, bias


def fuse_wavenet_params(params, scales, out_length, insize, lane=_LANE):
    """Build per-layer fused dense weights (filter||gate) + the final dense map."""
    layers_f = []
    lin, cin = 1, insize
    prev_pad = insize                                # kernel input width (unpadded)
    for (wf, bf, wg, bg), s in zip(params["layers"], scales):
        lout, cout = lin * s, wf.shape[2]
        d = lout * cout
        d_pad = _round_up(d, lane)
        src = np.arange(lout) // s                   # nearest upsample, integer scale
        mf, bfv = _conv3_as_dense(wf, bf, lin, lout, src)
        mg, bgv = _conv3_as_dense(wg, bg, lin, lout, src)
        din = lin * cin
        wcat = jnp.zeros((prev_pad, 2 * d_pad), jnp.float32)
        wcat = wcat.at[:din, :d].set(mf).at[:din, d_pad:d_pad + d].set(mg)
        bcat = jnp.zeros((1, 2 * d_pad), jnp.float32)
        bcat = bcat.at[0, :d].set(bfv).at[0, d_pad:d_pad + d].set(bgv)
        layers_f.append((wcat, bcat, d_pad))
        lin, cin, prev_pad = lout, cout, d_pad

    wlf, blf = params["last_filter"]
    wlc, blc = params["last_conv"]
    chid, cout = wlf.shape[2], wlc.shape[1]
    src = (np.arange(out_length) * lin) // out_length   # F.interpolate 'nearest'
    mlf, blfv = _conv3_as_dense(wlf, blf, lin, out_length, src)
    din = lin * chid
    d_fin = out_length * cout
    d_fin_pad = _round_up(d_fin, lane)
    # compose last_filter with the 1x1 last_conv
    mfin = jnp.einsum("dtc,co->dto", mlf.reshape(din, out_length, chid), wlc
                      ).reshape(din, d_fin)
    bfin_real = (blfv.reshape(out_length, chid) @ wlc
                 + jnp.reshape(blc, (1, cout))).reshape(d_fin)
    wfin = jnp.zeros((prev_pad, d_fin_pad), jnp.float32).at[:din, :d_fin].set(mfin)
    bfin = jnp.zeros((1, d_fin_pad), jnp.float32).at[0, :d_fin].set(bfin_real)
    return {"layers": layers_f, "final": (wfin, bfin),
            "out_length": out_length, "out_channels": cout, "d_final": d_fin}


# ---------------------------------------------------------------------------
# Forward (single pallas_call)
# ---------------------------------------------------------------------------
def _batch_tiling(batch):
    if batch <= 1:
        return max(batch, 1), 1
    tb = min(256, -(-batch // 2))        # >=2 tiles so both v7x TCs get work
    n_tiles = -(-batch // tb)
    return tb, n_tiles


def wavenet_decoder_forward(fused, x):
    """x: (..., insize) -> (..., out_length, out_channels)."""
    extra_dims = x.shape[:-1]
    insize = x.shape[-1]
    xb = x.reshape(-1, insize)
    batch = xb.shape[0]

    layers = fused["layers"]
    wfin, bfin = fused["final"]
    out_length, out_channels = fused["out_length"], fused["out_channels"]
    d_fin, d_fin_pad = fused["d_final"], wfin.shape[1]
    n_layers = len(layers)
    split_dims = tuple(int(d) for (_, _, d) in layers)

    tb, n_tiles = _batch_tiling(batch)
    pad = tb * n_tiles - batch
    if pad:
        xb = jnp.concatenate([xb, jnp.zeros((pad, insize), xb.dtype)], axis=0)
    x_tiles = xb.reshape(n_tiles, tb, insize)

    kernel = _make_fused_kernel(n_layers, split_dims)

    # Weights/biases use a constant block index -> DMA'd once, resident across steps.
    in_specs = [pl.BlockSpec((1, tb, insize), lambda i: (i, 0, 0))]
    operands = [x_tiles]
    for (w, b, _) in layers:
        in_specs.append(pl.BlockSpec(w.shape, lambda i: (0, 0)))
        in_specs.append(pl.BlockSpec(b.shape, lambda i: (0, 0)))
        operands.extend([w, b])
    in_specs.append(pl.BlockSpec(wfin.shape, lambda i: (0, 0)))
    in_specs.append(pl.BlockSpec(bfin.shape, lambda i: (0, 0)))
    operands.extend([wfin, bfin])

    out = pl.pallas_call(
        kernel,
        out_shape=jax.ShapeDtypeStruct((n_tiles, tb, d_fin_pad), x.dtype),
        grid=(n_tiles,),
        in_specs=in_specs,
        out_specs=pl.BlockSpec((1, tb, d_fin_pad), lambda i: (i, 0, 0)),
        compiler_params=pltpu.CompilerParams(dimension_semantics=("parallel",)),
    )(*operands)

    out = out.reshape(n_tiles * tb, d_fin_pad)[:batch, :d_fin]
    return out.reshape(extra_dims + (out_length, out_channels))


# ---------------------------------------------------------------------------
# Parameter construction (PyTorch-style uniform init) + pure-JAX reference
# ---------------------------------------------------------------------------
def init_conv_params(key, cin, cout, ksize):
    kw, kb = jax.random.split(key)
    bound = 1.0 / float(np.sqrt(cin * ksize))
    w = jax.random.uniform(kw, (ksize, cin, cout), jnp.float32, -bound, bound)
    b = jax.random.uniform(kb, (cout,), jnp.float32, -bound, bound)
    return w, b


def make_wavenet_params(key, insize, outsize, hidden_dims):
    out_length, out_channels = outsize
    dims = [insize] + list(hidden_dims) + [out_channels]
    params = {"layers": []}
    for i in range(len(dims) - 2):
        key, kf, kg = jax.random.split(key, 3)
        wf, bf = init_conv_params(kf, dims[i], dims[i + 1], 3)
        wg, bg = init_conv_params(kg, dims[i], dims[i + 1], 3)
        params["layers"].append((wf, bf, wg, bg))
    key, klf, klc = jax.random.split(key, 3)
    wlf, blf = init_conv_params(klf, dims[-2], dims[-2], 3)
    wlc3, blc = init_conv_params(klc, dims[-2], dims[-1], 1)
    params["last_filter"] = (wlf, blf)
    params["last_conv"] = (wlc3[0], blc)     # 1x1 conv -> (Chid, Cout) matmul
    return params


def _conv3_ref(x, w, b):
    xp = jnp.pad(x, ((0, 0), (1, 1), (0, 0)))
    L = x.shape[1]
    return sum(jnp.einsum("blc,cd->bld", xp[:, k:k + L, :], w[k])
               for k in range(3)) + b


def wavenet_ref(params, scales, out_length, x):
    extra_dims = x.shape[:-1]
    _x = x.reshape(-1, x.shape[-1])[:, None, :]
    for (wf, bf, wg, bg), s in zip(params["layers"], scales):
        xu = jnp.repeat(_x, s, axis=1)
        f = _conv3_ref(xu, wf, bf)
        g = _conv3_ref(xu, wg, bg)
        _x = jnp.tanh(f) * jax.nn.sigmoid(g)
    idx = (jnp.arange(out_length) * _x.shape[1]) // out_length
    xu = _x[:, idx, :]
    wlf, blf = params["last_filter"]
    wlc, blc = params["last_conv"]
    h = _conv3_ref(xu, wlf, blf)
    out = jnp.einsum("blc,cd->bld", h, wlc) + blc
    return out.reshape(extra_dims + out.shape[-2:])


# ---------------------------------------------------------------------------
if __name__ == "__main__":
    key = jax.random.PRNGKey(0)
    kparam, kx = jax.random.split(key)

    insize = 8
    hidden_dims = [16, 32]
    scales = [2, 2]
    outsize = (8, 4)          # (out_length, out_channels)
    batch = 2

    params = make_wavenet_params(kparam, insize, outsize, hidden_dims)
    fused = fuse_wavenet_params(params, scales, outsize[0], insize)
    x = jax.random.normal(kx, (batch, insize), jnp.float32)

    fwd = jax.jit(functools.partial(wavenet_decoder_forward, fused))
    out = jax.block_until_ready(fwd(x))

    assert out.shape == (batch, outsize[0], outsize[1]), out.shape

    ref = wavenet_ref(params, scales, outsize[0], x)
    max_err = float(jnp.max(jnp.abs(out - ref)))
    assert jnp.allclose(out, ref, atol=1e-5, rtol=1e-5), max_err

    print("KERNEL_OK")
</pallas_src>

<mosaic_0001>
module attributes {stable_mosaic.version = 11 : i64} {
  func.func @kernel(%arg0: i32, %arg1: memref<1x1x8xf32, #tpu.memory_space<vmem>>, %arg2: memref<8x256xf32, #tpu.memory_space<vmem>>, %arg3: memref<1x256xf32, #tpu.memory_space<vmem>>, %arg4: memref<128x256xf32, #tpu.memory_space<vmem>>, %arg5: memref<1x256xf32, #tpu.memory_space<vmem>>, %arg6: memref<128x128xf32, #tpu.memory_space<vmem>>, %arg7: memref<1x128xf32, #tpu.memory_space<vmem>>, %arg8: memref<1x1x128xf32, #tpu.memory_space<vmem>>) attributes {dimension_semantics = [#tpu.dimension_semantics<parallel>], iteration_bounds = array<i64: 2>, scalar_prefetch = 0 : i64, scratch_operands = 0 : i64, tpu.core_type = #tpu.core_type<tc>, window_params = [{transform_indices = @transform_0, window_bounds = array<i64: 1, 1, 8>}, {pipeline_mode = #tpu.pipeline_mode<synchronous>, transform_indices = @transform_1, window_bounds = array<i64: 8, 256>}, {pipeline_mode = #tpu.pipeline_mode<synchronous>, transform_indices = @transform_2, window_bounds = array<i64: 1, 256>}, {pipeline_mode = #tpu.pipeline_mode<synchronous>, transform_indices = @transform_3, window_bounds = array<i64: 128, 256>}, {pipeline_mode = #tpu.pipeline_mode<synchronous>, transform_indices = @transform_4, window_bounds = array<i64: 1, 256>}, {pipeline_mode = #tpu.pipeline_mode<synchronous>, transform_indices = @transform_5, window_bounds = array<i64: 128, 128>}, {pipeline_mode = #tpu.pipeline_mode<synchronous>, transform_indices = @transform_6, window_bounds = array<i64: 1, 128>}, {transform_indices = @transform_7, window_bounds = array<i64: 1, 1, 128>}]} {
    %c0 = arith.constant 0 : index
    %c0_0 = arith.constant 0 : index
    %c0_1 = arith.constant 0 : index
    %0 = vector.load %arg1[%c0, %c0_0, %c0_1] : memref<1x1x8xf32, #tpu.memory_space<vmem>>, vector<1x1x8xf32>
    %1 = vector.shape_cast %0 : vector<1x1x8xf32> to vector<1x8xf32>
    %c0_2 = arith.constant 0 : index
    %c0_3 = arith.constant 0 : index
    %2 = vector.load %arg2[%c0_2, %c0_3] : memref<8x256xf32, #tpu.memory_space<vmem>>, vector<8x256xf32>
    %c0_4 = arith.constant 0 : index
    %c0_5 = arith.constant 0 : index
    %3 = vector.load %arg3[%c0_4, %c0_5] : memref<1x256xf32, #tpu.memory_space<vmem>>, vector<1x256xf32>
    %cst = arith.constant dense<0.000000e+00> : vector<1x256xf32>
    %4 = tpu.matmul %1, %2, %cst {dimension_numbers = #tpu.dot_dimension_numbers<[1], [0], [0], [1], [0, 0, 1, 1], [], []>} : vector<1x8xf32>, vector<8x256xf32>, vector<1x256xf32> -> vector<1x256xf32>
    %5 = arith.addf %4, %3 : vector<1x256xf32>
    %6 = vector.extract_strided_slice %5 {offsets = [0, 0], sizes = [1, 128], strides = [1, 1]} : vector<1x256xf32> to vector<1x128xf32>
    %7 = math.tanh %6 : vector<1x128xf32>
    %8 = vector.extract_strided_slice %5 {offsets = [0, 128], sizes = [1, 128], strides = [1, 1]} : vector<1x256xf32> to vector<1x128xf32>
    %9 = arith.negf %8 : vector<1x128xf32>
    %10 = math.exp %9 : vector<1x128xf32>
    %cst_6 = arith.constant 1.000000e+00 : f32
    %11 = vector.broadcast %cst_6 : f32 to vector<1x128xf32>
    %12 = arith.addf %11, %10 : vector<1x128xf32>
    %13 = arith.divf %11, %12 : vector<1x128xf32>
    %14 = arith.mulf %7, %13 : vector<1x128xf32>
    %c0_7 = arith.constant 0 : index
    %c0_8 = arith.constant 0 : index
    %15 = vector.load %arg4[%c0_7, %c0_8] : memref<128x256xf32, #tpu.memory_space<vmem>>, vector<128x256xf32>
    %c0_9 = arith.constant 0 : index
    %c0_10 = arith.constant 0 : index
    %16 = vector.load %arg5[%c0_9, %c0_10] : memref<1x256xf32, #tpu.memory_space<vmem>>, vector<1x256xf32>
    %cst_11 = arith.constant dense<0.000000e+00> : vector<1x256xf32>
    %17 = tpu.matmul %14, %15, %cst_11 {dimension_numbers = #tpu.dot_dimension_numbers<[1], [0], [0], [1], [0, 0, 1, 1], [], []>} : vector<1x128xf32>, vector<128x256xf32>, vector<1x256xf32> -> vector<1x256xf32>
    %18 = arith.addf %17, %16 : vector<1x256xf32>
    %19 = vector.extract_strided_slice %18 {offsets = [0, 0], sizes = [1, 128], strides = [1, 1]} : vector<1x256xf32> to vector<1x128xf32>
    %20 = math.tanh %19 : vector<1x128xf32>
    %21 = vector.extract_strided_slice %18 {offsets = [0, 128], sizes = [1, 128], strides = [1, 1]} : vector<1x256xf32> to vector<1x128xf32>
    %22 = arith.negf %21 : vector<1x128xf32>
    %23 = math.exp %22 : vector<1x128xf32>
    %cst_12 = arith.constant 1.000000e+00 : f32
    %24 = vector.broadcast %cst_12 : f32 to vector<1x128xf32>
    %25 = arith.addf %24, %23 : vector<1x128xf32>
    %26 = arith.divf %24, %25 : vector<1x128xf32>
    %27 = arith.mulf %20, %26 : vector<1x128xf32>
    %c0_13 = arith.constant 0 : index
    %c0_14 = arith.constant 0 : index
    %28 = vector.load %arg6[%c0_13, %c0_14] : memref<128x128xf32, #tpu.memory_space<vmem>>, vector<128x128xf32>
    %c0_15 = arith.constant 0 : index
    %c0_16 = arith.constant 0 : index
    %29 = vector.load %arg7[%c0_15, %c0_16] : memref<1x128xf32, #tpu.memory_space<vmem>>, vector<1x128xf32>
    %cst_17 = arith.constant dense<0.000000e+00> : vector<1x128xf32>
    %30 = tpu.matmul %27, %28, %cst_17 {dimension_numbers = #tpu.dot_dimension_numbers<[1], [0], [0], [1], [0, 0, 1, 1], [], []>} : vector<1x128xf32>, vector<128x128xf32>, vector<1x128xf32> -> vector<1x128xf32>
    %31 = arith.addf %30, %29 : vector<1x128xf32>
    %c0_18 = arith.constant 0 : index
    %c0_19 = arith.constant 0 : index
    %c0_20 = arith.constant 0 : index
    %32 = vector.load %arg8[%c0_18, %c0_19, %c0_20] : memref<1x1x128xf32, #tpu.memory_space<vmem>>, vector<1x1x128xf32>
    %33 = vector.shape_cast %32 : vector<1x1x128xf32> to vector<1x128xf32>
    %34 = vector.shape_cast %31 : vector<1x128xf32> to vector<1x1x128xf32>
    tpu.vector_store %arg8[%c0_18, %c0_19, %c0_20], %34 {strides = array<i32>} : memref<1x1x128xf32, #tpu.memory_space<vmem>>, vector<1x1x128xf32>,
    return
  }
  func.func @transform_0(%arg0: i32) -> (i32, i32, i32) {
    %c0_i32 = arith.constant 0 : i32
    %c0_i32_0 = arith.constant 0 : i32
    %c0_i32_1 = arith.constant 0 : i32
    return %arg0, %c0_i32, %c0_i32_0 : i32, i32, i32
  }
  func.func @transform_1(%arg0: i32) -> (i32, i32) {
    %c0_i32 = arith.constant 0 : i32
    %c0_i32_0 = arith.constant 0 : i32
    %c0_i32_1 = arith.constant 0 : i32
    return %c0_i32, %c0_i32_0 : i32, i32
  }
  func.func @transform_2(%arg0: i32) -> (i32, i32) {
    %c0_i32 = arith.constant 0 : i32
    %c0_i32_0 = arith.constant 0 : i32
    %c0_i32_1 = arith.constant 0 : i32
    return %c0_i32, %c0_i32_0 : i32, i32
  }
  func.func @transform_3(%arg0: i32) -> (i32, i32) {
    %c0_i32 = arith.constant 0 : i32
    %c0_i32_0 = arith.constant 0 : i32
    %c0_i32_1 = arith.constant 0 : i32
    return %c0_i32, %c0_i32_0 : i32, i32
  }
  func.func @transform_4(%arg0: i32) -> (i32, i32) {
    %c0_i32 = arith.constant 0 : i32
    %c0_i32_0 = arith.constant 0 : i32
    %c0_i32_1 = arith.constant 0 : i32
    return %c0_i32, %c0_i32_0 : i32, i32
  }
  func.func @transform_5(%arg0: i32) -> (i32, i32) {
    %c0_i32 = arith.constant 0 : i32
    %c0_i32_0 = arith.constant 0 : i32
    %c0_i32_1 = arith.constant 0 : i32
    return %c0_i32, %c0_i32_0 : i32, i32
  }
  func.func @transform_6(%arg0: i32) -> (i32, i32) {
    %c0_i32 = arith.constant 0 : i32
    %c0_i32_0 = arith.constant 0 : i32
    %c0_i32_1 = arith.constant 0 : i32
    return %c0_i32, %c0_i32_0 : i32, i32
  }
  func.func @transform_7(%arg0: i32) -> (i32, i32, i32) {
    %c0_i32 = arith.constant 0 : i32
    %c0_i32_0 = arith.constant 0 : i32
    %c0_i32_1 = arith.constant 0 : i32
    return %arg0, %c0_i32, %c0_i32_0 : i32, i32, i32
  }
}

</mosaic_0001>

<llo_original>
// kernel: wavenet_decoder_forward.1
$region0: #{wavenet_decoder_forward.1}
  #allocation0 [shape = 'u32[]', space=smem, size = 0x4, offset = 0x4, fixed_abs, tag = 'smem constant byte address 0x4 - core index']
  #allocation1 [shape = 'u32[144,128]{1,0:T(1,128)}', space=vmem, size = 0x12000, scoped, tag = 'internal scratch']
  %s0 = inlined_call_operand.vmem [shape: f32[2,1,8], index: 0, kind: input, shape index: {}]
  %s1 = inlined_call_operand.hbm [shape: f32[8,256], index: 1, kind: input, shape index: {}]
  %s2 = inlined_call_operand.vmem [shape: f32[1,256], index: 2, kind: input, shape index: {}]
  %s3 = inlined_call_operand.hbm [shape: f32[128,256], index: 3, kind: input, shape index: {}]
  %s4 = inlined_call_operand.vmem [shape: f32[1,256], index: 4, kind: input, shape index: {}]
  %s5 = inlined_call_operand.hbm [shape: f32[128,128], index: 5, kind: input, shape index: {}]
  %s6 = inlined_call_operand.vmem [shape: f32[1,128], index: 6, kind: input, shape index: {}]
  %s7 = inlined_call_operand.vmem [shape: f32[2,1,128], index: 7, kind: output, shape index: {}]
  %s8 = sld [smem:[#allocation0]]
  $region73: #{wavenet_decoder_forward.1} parent=0
    _
  %s10 = ssub.s32 1, %s8
  %s11 = scalar_select 0, %s10, %s8
  $region1: #{wavenet_decoder_forward.1} parent=0
    #allocation2 [shape = 'u8[8192]{0}', space=vmem, size = 0x2000, scoped, tag = 'input window, operand 1, single buffered']
    #allocation3 [shape = 's32[2]{0}', space=sflag, size = 0x8, scoped, tag = 'scoped memory for wavenet_decoder_forward.1']
    #allocation4 [shape = 'u8[131072]{0}', space=vmem, size = 0x20000, scoped, tag = 'input window, operand 3, single buffered']
    #allocation5 [shape = 's32[1]{0}', space=sflag, size = 0x4, scoped, tag = 'scoped memory for wavenet_decoder_forward.1']
    #allocation6 [shape = 'u8[65536]{0}', space=vmem, size = 0x10000, scoped, tag = 'input window, operand 5, single buffered']
    %12 = vsyncpa [#allocation3], 0
    %13 = vsyncpa [#allocation5], 0
    loop: start=0, step=1, limit=4
    $region2: #{wavenet_decoder_forward.1} parent=1 // loop_pre_header
      _
    $region3: #{wavenet_decoder_forward.1} parent=1 // loop_header
      %s15 = sphi 0, %s19
      %p16 = scmp.ge.s32.totalorder %s15, 4
      %s25 = sphi 0, %s27
      %s28 = sphi 0, %s25
      %s29 = sphi 0, %s28
      %s45 = sphi 0, %s29
      %s49 = sphi 0, %s49
      %s51 = sphi 0, %s49
      %s52 = sphi 0, %s51
      %s66 = sphi 0, %s52
      %s70 = sphi 0, %s70
      %s72 = sphi 0, %s70
      %s73 = sphi 0, %s72
      %s87 = sphi 0, %s73
      %s91 = sphi 0, %s91
      %s93 = sphi 0, %s91
      %s94 = sphi 0, %s93
      %s108 = sphi 0, %s94
      %s112 = sphi 0, %s112
      %s114 = sphi 0, %s112
      %s115 = sphi 0, %s114
      %s129 = sphi 0, %s115
      %s133 = sphi 0, %s133
      %s135 = sphi 0, %s133
      %s136 = sphi 0, %s135
      %s150 = sphi 0, %s136
      %s154 = sphi 0, %s154
      %s156 = sphi 0, %s154
      %s157 = sphi 0, %s156
      %s171 = sphi 0, %s157
      %s177 = sphi 0, %s179
      %s180 = sphi 0, %s177
      %s181 = sphi 0, %s180
      %s197 = sphi 0, %s181
    $region4: #{wavenet_decoder_forward.1} parent=1 // loop_header_branch
      %18 = sbr.rel (%p16) target = $region8
    $region5: #{wavenet_decoder_forward.1} parent=1 // loop_body
      %s20 = ssub.s32 %s15, 1
      %s21 = ssub.s32 %s15, 2
      %s22 = sadd.s32 %s15, 1
      %s23 = ssub.s32 %s15, %s22
      %p24 = scmp.eq.s32.totalorder %s23, 0
      %s26 = sadd.s32 %s25, 1
      %s27 = scalar_select %p24, %s25, %s26
      %p30 = pneg %p24
      %p31 = scmp.eq.s32.totalorder %s15, 1
      %p32 = por %p30, %p31
      %p33 = scmp.ne.s32.totalorder %s25, %s28
      %p34 = scmp.eq.s32.totalorder %s15, 0
      %p35 = por %p33, %p34
      %p36 = scmp.ne.s32.totalorder %s25, %s28
      %p37 = scmp.eq.s32.totalorder %s20, 1
      %p38 = por %p36, %p37
      %p39 = scmp.ne.s32.totalorder %s28, %s29
      %p40 = scmp.eq.s32.totalorder %s20, 0
      %p41 = por %p39, %p40
      %p42 = scmp.ne.s32.totalorder %s28, %s29
      %p43 = scmp.eq.s32.totalorder %s21, 1
      %p44 = por %p42, %p43
      %p46 = scmp.ne.s32.totalorder %s29, %s45
      %p47 = scmp.eq.s32.totalorder %s21, 0
      %p48 = por %p46, %p47
      %s50 = sadd.s32 %s49, 1
      %p53 = scmp.eq.s32.totalorder %s15, 1
      %p54 = scmp.ne.s32.totalorder %s49, %s51
      %p55 = scmp.eq.s32.totalorder %s15, 0
      %p56 = por %p54, %p55
      %p57 = scmp.ne.s32.totalorder %s49, %s51
      %p58 = scmp.eq.s32.totalorder %s20, 1
      %p59 = por %p57, %p58
      %p60 = scmp.ne.s32.totalorder %s51, %s52
      %p61 = scmp.eq.s32.totalorder %s20, 0
      %p62 = por %p60, %p61
      %p63 = scmp.ne.s32.totalorder %s51, %s52
      %p64 = scmp.eq.s32.totalorder %s21, 1
      %p65 = por %p63, %p64
      %p67 = scmp.ne.s32.totalorder %s52, %s66
      %p68 = scmp.eq.s32.totalorder %s21, 0
      %p69 = por %p67, %p68
      %s71 = sadd.s32 %s70, 1
      %p74 = scmp.eq.s32.totalorder %s15, 1
      %p75 = scmp.ne.s32.totalorder %s70, %s72
      %p76 = scmp.eq.s32.totalorder %s15, 0
      %p77 = por %p75, %p76
      %p78 = scmp.ne.s32.totalorder %s70, %s72
      %p79 = scmp.eq.s32.totalorder %s20, 1
      %p80 = por %p78, %p79
      %p81 = scmp.ne.s32.totalorder %s72, %s73
      %p82 = scmp.eq.s32.totalorder %s20, 0
      %p83 = por %p81, %p82
      %p84 = scmp.ne.s32.totalorder %s72, %s73
      %p85 = scmp.eq.s32.totalorder %s21, 1
      %p86 = por %p84, %p85
      %p88 = scmp.ne.s32.totalorder %s73, %s87
      %p89 = scmp.eq.s32.totalorder %s21, 0
      %p90 = por %p88, %p89
      %s92 = sadd.s32 %s91, 1
      %p95 = scmp.eq.s32.totalorder %s15, 1
      %p96 = scmp.ne.s32.totalorder %s91, %s93
      %p97 = scmp.eq.s32.totalorder %s15, 0
      %p98 = por %p96, %p97
      %p99 = scmp.ne.s32.totalorder %s91, %s93
      %p100 = scmp.eq.s32.totalorder %s20, 1
      %p101 = por %p99, %p100
      %p102 = scmp.ne.s32.totalorder %s93, %s94
      %p103 = scmp.eq.s32.totalorder %s20, 0
      %p104 = por %p102, %p103
      %p105 = scmp.ne.s32.totalorder %s93, %s94
      %p106 = scmp.eq.s32.totalorder %s21, 1
      %p107 = por %p105, %p106
      %p109 = scmp.ne.s32.totalorder %s94, %s108
      %p110 = scmp.eq.s32.totalorder %s21, 0
      %p111 = por %p109, %p110
      %s113 = sadd.s32 %s112, 1
      %p116 = scmp.eq.s32.totalorder %s15, 1
      %p117 = scmp.ne.s32.totalorder %s112, %s114
      %p118 = scmp.eq.s32.totalorder %s15, 0
      %p119 = por %p117, %p118
      %p120 = scmp.ne.s32.totalorder %s112, %s114
      %p121 = scmp.eq.s32.totalorder %s20, 1
      %p122 = por %p120, %p121
      %p123 = scmp.ne.s32.totalorder %s114, %s115
      %p124 = scmp.eq.s32.totalorder %s20, 0
      %p125 = por %p123, %p124
      %p126 = scmp.ne.s32.totalorder %s114, %s115
      %p127 = scmp.eq.s32.totalorder %s21, 1
      %p128 = por %p126, %p127
      %p130 = scmp.ne.s32.totalorder %s115, %s129
      %p131 = scmp.eq.s32.totalorder %s21, 0
      %p132 = por %p130, %p131
      %s134 = sadd.s32 %s133, 1
      %p137 = scmp.eq.s32.totalorder %s15, 1
      %p138 = scmp.ne.s32.totalorder %s133, %s135
      %p139 = scmp.eq.s32.totalorder %s15, 0
      %p140 = por %p138, %p139
      %p141 = scmp.ne.s32.totalorder %s133, %s135
      %p142 = scmp.eq.s32.totalorder %s20, 1
      %p143 = por %p141, %p142
      %p144 = scmp.ne.s32.totalorder %s135, %s136
      %p145 = scmp.eq.s32.totalorder %s20, 0
      %p146 = por %p144, %p145
      %p147 = scmp.ne.s32.totalorder %s135, %s136
      %p148 = scmp.eq.s32.totalorder %s21, 1
      %p149 = por %p147, %p148
      %p151 = scmp.ne.s32.totalorder %s136, %s150
      %p152 = scmp.eq.s32.totalorder %s21, 0
      %p153 = por %p151, %p152
      %s155 = sadd.s32 %s154, 1
      %p158 = scmp.eq.s32.totalorder %s15, 1
      %p159 = scmp.ne.s32.totalorder %s154, %s156
      %p160 = scmp.eq.s32.totalorder %s15, 0
      %p161 = por %p159, %p160
      %p162 = scmp.ne.s32.totalorder %s154, %s156
      %p163 = scmp.eq.s32.totalorder %s20, 1
      %p164 = por %p162, %p163
      %p165 = scmp.ne.s32.totalorder %s156, %s157
      %p166 = scmp.eq.s32.totalorder %s20, 0
      %p167 = por %p165, %p166
      %p168 = scmp.ne.s32.totalorder %s156, %s157
      %p169 = scmp.eq.s32.totalorder %s21, 1
      %p170 = por %p168, %p169
      %p172 = scmp.ne.s32.totalorder %s157, %s171
      %p173 = scmp.eq.s32.totalorder %s21, 0
      %p174 = por %p172, %p173
      %s175 = ssub.s32 %s15, %s22
      %p176 = scmp.eq.s32.totalorder %s175, 0
      %s178 = sadd.s32 %s177, 1
      %s179 = scalar_select %p176, %s177, %s178
      %p182 = pneg %p176
      %p183 = scmp.eq.s32.totalorder %s15, 1
      %p184 = por %p182, %p183
      %p185 = scmp.ne.s32.totalorder %s177, %s180
      %p186 = scmp.eq.s32.totalorder %s15, 0
      %p187 = por %p185, %p186
      %p188 = scmp.ne.s32.totalorder %s177, %s180
      %p189 = scmp.eq.s32.totalorder %s20, 1
      %p190 = por %p188, %p189
      %p191 = scmp.ne.s32.totalorder %s180, %s181
      %p192 = scmp.eq.s32.totalorder %s20, 0
      %p193 = por %p191, %p192
      %p194 = scmp.ne.s32.totalorder %s180, %s181
      %p195 = scmp.eq.s32.totalorder %s21, 1
      %p196 = por %p194, %p195
      %p198 = scmp.ne.s32.totalorder %s181, %s197
      %p199 = scmp.eq.s32.totalorder %s21, 0
      %p200 = por %p198, %p199
      %p201 = scmp.le.s32.totalorder 1, %s15
      %p202 = scmp.lt.s32.totalorder %s15, 3
      %p203 = pnand %p201, %p202
      %p204 = pneg %p203
      // Predicated region
      $region9: #{wavenet_decoder_forward.1} parent=5 // pred_check
        _
      $region10: #{wavenet_decoder_forward.1} parent=5 // pred_check_branch
        %206 = sbr.rel (%p203) target = $region12
      $region11: #{wavenet_decoder_forward.1} parent=5 // pred_region
        %s207 = ssub.s32 %s15, 1
        // Predicated region
        $region13: #{wavenet_decoder_forward.1} parent=11 // pred_check
          %p208 = pneg %p62
        $region14: #{wavenet_decoder_forward.1} parent=11 // pred_check_branch
          %210 = sbr.rel (%p208) target = $region16
        $region15: #{wavenet_decoder_forward.1} parent=11 // pred_region
          %s212 = ssub.s32 256, 256
          %213 = vsyncadd [#allocation3], %s212
          %s215 = sshll.u32 [#allocation2], 4
          %s216 = int_to_ptr.vmem [resolvable:$true] %s215
          %218 = dma.hbm_to_vmem [thread:$0]  %s1, 256, %s216, [#allocation3]
        $region16: #{wavenet_decoder_forward.1} parent=11 // pred_fallthru
          _
        // Predicated region
        $region17: #{wavenet_decoder_forward.1} parent=11 // pred_check
          %p219 = pneg %p83
        $region18: #{wavenet_decoder_forward.1} parent=11 // pred_check_branch
          %221 = sbr.rel (%p219) target = $region20
        $region19: #{wavenet_decoder_forward.1} parent=11 // pred_region
          _
        $region20: #{wavenet_decoder_forward.1} parent=11 // pred_fallthru
          _
        // Predicated region
        $region21: #{wavenet_decoder_forward.1} parent=11 // pred_check
          %p222 = pneg %p104
        $region22: #{wavenet_decoder_forward.1} parent=11 // pred_check_branch
          %224 = sbr.rel (%p222) target = $region24
        $region23: #{wavenet_decoder_forward.1} parent=11 // pred_region
          %s226 = ssub.s32 4096, 4096
          %227 = vsyncadd [#allocation5], %s226
          %s228 = sshll.u32 [#allocation4], 4
          %s229 = int_to_ptr.vmem [resolvable:$true] %s228
          %234 = dma.hbm_to_vmem [thread:$0]  %s3, 4096, %s229, [#allocation5], 256, 256, 16
        $region24: #{wavenet_decoder_forward.1} parent=11 // pred_fallthru
          _
        // Predicated region
        $region25: #{wavenet_decoder_forward.1} parent=11 // pred_check
          %p235 = pneg %p125
        $region26: #{wavenet_decoder_forward.1} parent=11 // pred_check_branch
          %237 = sbr.rel (%p235) target = $region28
        $region27: #{wavenet_decoder_forward.1} parent=11 // pred_region
          _
        $region28: #{wavenet_decoder_forward.1} parent=11 // pred_fallthru
          _
        // Predicated region
        $region29: #{wavenet_decoder_forward.1} parent=11 // pred_check
          %p238 = pneg %p146
        $region30: #{wavenet_decoder_forward.1} parent=11 // pred_check_branch
          %240 = sbr.rel (%p238) target = $region32
        $region31: #{wavenet_decoder_forward.1} parent=11 // pred_region
          %s242 = ssub.s32 2048, 2048
          %243 = vsyncadd [#allocation5], %s242
          %s244 = sshll.u32 [#allocation6], 4
          %s245 = int_to_ptr.vmem [resolvable:$true] %s244
          %250 = dma.hbm_to_vmem [thread:$0]  %s5, 2048, %s245, [#allocation5], 128, 128, 8
        $region32: #{wavenet_decoder_forward.1} parent=11 // pred_fallthru
          _
        // Predicated region
        $region33: #{wavenet_decoder_forward.1} parent=11 // pred_check
          %p251 = pneg %p167
        $region34: #{wavenet_decoder_forward.1} parent=11 // pred_check_branch
          %253 = sbr.rel (%p251) target = $region36
        $region35: #{wavenet_decoder_forward.1} parent=11 // pred_region
          _
        $region36: #{wavenet_decoder_forward.1} parent=11 // pred_fallthru
          _
      $region12: #{wavenet_decoder_forward.1} parent=5 // pred_fallthru
        _
      %p254 = scmp.lt.s32.totalorder %s15, 2
      // Predicated region
      $region37: #{wavenet_decoder_forward.1} parent=5 // pred_check
        %p255 = pneg %p254
      $region38: #{wavenet_decoder_forward.1} parent=5 // pred_check_branch
        %257 = sbr.rel (%p255) target = $region40
      $region39: #{wavenet_decoder_forward.1} parent=5 // pred_region
        // Predicated region
        $region41: #{wavenet_decoder_forward.1} parent=39 // pred_check
          %p258 = pneg %p35
        $region42: #{wavenet_decoder_forward.1} parent=39 // pred_check_branch
          %260 = sbr.rel (%p258) target = $region44
        $region43: #{wavenet_decoder_forward.1} parent=39 // pred_region
          %p261 = scmp.lt.s32.totalorder %s15, 1
          %s262 = scalar_select %p261, %s15, 1
          %s263 = scalar_lea.vmem %s0, %s262
        $region44: #{wavenet_decoder_forward.1} parent=39 // pred_fallthru
          _
      $region40: #{wavenet_decoder_forward.1} parent=5 // pred_fallthru
        _
      %p264 = scmp.le.s32.totalorder 1, %s15
      %p265 = scmp.lt.s32.totalorder %s15, 3
      %p266 = pnand %p264, %p265
      %p267 = pneg %p266
      // Predicated region
      $region45: #{wavenet_decoder_forward.1} parent=5 // pred_check
        _
      $region46: #{wavenet_decoder_forward.1} parent=5 // pred_check_branch
        %269 = sbr.rel (%p266) target = $region48
      $region47: #{wavenet_decoder_forward.1} parent=5 // pred_region
        %s270 = ssub.s32 %s15, 1
        // Predicated region
        $region49: #{wavenet_decoder_forward.1} parent=47 // pred_check
          %p271 = pneg %p62
        $region50: #{wavenet_decoder_forward.1} parent=47 // pred_check_branch
          %273 = sbr.rel (%p271) target = $region52
        $region51: #{wavenet_decoder_forward.1} parent=47 // pred_region
          %274 = dma.done [#allocation3], 256
        $region52: #{wavenet_decoder_forward.1} parent=47 // pred_fallthru
          _
        // Predicated region
        $region53: #{wavenet_decoder_forward.1} parent=47 // pred_check
          %p275 = pneg %p104
        $region54: #{wavenet_decoder_forward.1} parent=47 // pred_check_branch
          %277 = sbr.rel (%p275) target = $region56
        $region55: #{wavenet_decoder_forward.1} parent=47 // pred_region
          %278 = dma.done [#allocation5], 4096
        $region56: #{wavenet_decoder_forward.1} parent=47 // pred_fallthru
          _
        // Predicated region
        $region57: #{wavenet_decoder_forward.1} parent=47 // pred_check
          %p279 = pneg %p146
        $region58: #{wavenet_decoder_forward.1} parent=47 // pred_check_branch
          %281 = sbr.rel (%p279) target = $region60
        $region59: #{wavenet_decoder_forward.1} parent=47 // pred_region
          %282 = dma.done [#allocation5], 2048
        $region60: #{wavenet_decoder_forward.1} parent=47 // pred_fallthru
          _
        %p283 = scmp.lt.s32.totalorder %s20, 1
        %s284 = scalar_select %p283, %s20, 1
        %s285 = scalar_lea.vmem %s0, %s284
        %p286 = pneg %p41
        %p287 = pneg %p38
        %p288 = pneg %p62
        %p289 = pneg %p59
        %p290 = pneg %p83
        %p291 = pneg %p80
        %p292 = pneg %p104
        %p293 = pneg %p101
        %p294 = pneg %p125
        %p295 = pneg %p122
        %p296 = pneg %p146
        %p297 = pneg %p143
        %p298 = pneg %p167
        %p299 = pneg %p164
        %p300 = pneg %p193
        %p301 = pneg %p190
        %p302 = scmp.lt.s32.totalorder %s20, 1
        %s303 = scalar_select %p302, %s20, 1
        %s304 = scalar_lea.vmem %s7, %s303
        %p305 = scmp.lt.s32.totalorder %s20, 1
        %s306 = scalar_select %p305, %s20, 1
        %s307 = scalar_lea.vmem %s0, %s306
        %p308 = scmp.lt.s32.totalorder %s20, 1
        %s309 = scalar_select %p308, %s20, 1
        %s310 = scalar_lea.vmem %s7, %s309
        %v311 = vld [vmem:[%s307] sm:$0x1]
        %v312 = vld [vmem:[#allocation2] sm:$0xff]
        %v313 = vld [vmem:[#allocation2 + $0x8] sm:$0xff]
        %v314 = vld [vmem:[%s2] sm:$0x3]
        %v316 = vlaneseq
        %v317 = vshrl.u32 %v316, 7
        %v318 = vsub.s32 0, %v317
        %v319 = vrot.slane %v314, %v318
        %v320 = vlaneseq
        %v321 = vshrl.u32 %v320, 7
        %v322 = vsub.s32 1, %v321
        %v323 = vrot.slane %v314, %v322
        %vm326 = vcmask 64512
        %v328 = vsel %vm326, %v311, 0
        %330 = vmatprep.subr.mxu0 %v313
        %331 = vmatpush1.msra.mxu0 %v312
        %332 = vmatprep.subr.mxu0 0.0
        %333 = vmatpush1.msra.mxu0 0.0
        %334 = vmatprep.subr.mxu0 0.0
        %335 = vmatpush1.msra.mxu0 0.0
        %336 = vmatprep.subr.mxu0 0.0
        %337 = vmatpush1.msra.mxu0 0.0
        %338 = vmatprep.subr.mxu0 0.0
        %339 = vmatpush1.msra.mxu0 0.0
        %340 = vmatprep.subr.mxu0 0.0
        %341 = vmatpush1.msra.mxu0 0.0
        %342 = vmatprep.subr.mxu0 0.0
        %343 = vmatpush1.msra.mxu0 0.0
        %344 = vmatprep.subr.mxu0 0.0
        %345 = vmatpush1.msra.mxu0 0.0
        %346 = vmatprep.subr.mxu0 0.0
        %347 = vmatpush1.msra.mxu0 0.0
        %348 = vmatprep.subr.mxu0 0.0
        %349 = vmatpush1.msra.mxu0 0.0
        %350 = vmatprep.subr.mxu0 0.0
        %351 = vmatpush1.msra.mxu0 0.0
        %352 = vmatprep.subr.mxu0 0.0
        %353 = vmatpush1.msra.mxu0 0.0
        %354 = vmatprep.subr.mxu0 0.0
        %355 = vmatpush1.msra.mxu0 0.0
        %356 = vmatprep.subr.mxu0 0.0
        %357 = vmatpush1.msra.mxu0 0.0
        %358 = vmatprep.subr.mxu0 0.0
        %359 = vmatpush1.msra.mxu0 0.0
        %360 = vmatprep.subr.mxu0 0.0
        %361 = vmatpush1.msra.mxu0 0.0
        %362 = vmatprep.subr.mxu0 0.0
        %363 = vmatpush1.msra.mxu0 0.0
        %364 = vmatprep.subr.mxu0 0.0
        %365 = vmatpush1.msra.mxu0 0.0
        %366 = vmatprep.subr.mxu0 0.0
        %367 = vmatpush1.msra.mxu0 0.0
        %368 = vmatprep.subr.mxu0 0.0
        %369 = vmatpush1.msra.mxu0 0.0
        %370 = vmatprep.subr.mxu0 0.0
        %371 = vmatpush1.msra.mxu0 0.0
        %372 = vmatprep.subr.mxu0 0.0
        %373 = vmatpush1.msra.mxu0 0.0
        %374 = vmatprep.subr.mxu0 0.0
        %375 = vmatpush1.msra.mxu0 0.0
        %376 = vmatprep.subr.mxu0 0.0
        %377 = vmatpush1.msra.mxu0 0.0
        %378 = vmatprep.subr.mxu0 0.0
        %379 = vmatpush1.msra.mxu0 0.0
        %380 = vmatprep.subr.mxu0 0.0
        %381 = vmatpush1.msra.mxu0 0.0
        %382 = vmatprep.subr.mxu0 0.0
        %383 = vmatpush1.msra.mxu0 0.0
        %384 = vmatprep.subr.mxu0 0.0
        %385 = vmatpush1.msra.mxu0 0.0
        %386 = vmatprep.subr.mxu0 0.0
        %387 = vmatpush1.msra.mxu0 0.0
        %388 = vmatprep.subr.mxu0 0.0
        %389 = vmatpush1.msra.mxu0 0.0
        %390 = vmatprep.subr.mxu0 0.0
        %391 = vmatpush1.msra.mxu0 0.0
        %392 = vmatprep.subr.mxu0 0.0
        %393 = vmatpush1.msra.mxu0 0.0
        %394 = vmatprep.mubr.f32.mxu0 0.0
        %395 = vmatmul.mubr.f32.gmra.mrb[0].mxu0 %v328
        %v396 = vpop.f32.mrb[0].mxu0
        %v397 = vadd.f32 %v319, %v396
        %v398 = vpop.f32.mrb[0].mxu0
        %v399 = vadd.f32 %v323, %v398
        %400 = vdwg.mxu0
        %v401 = vtanh.pop %v397
        %v402 = vxor.u32 %v399, 2147483648
        %v403 = vmul.f32 %v402, 1.442695
        %v404 = vpow.pop %v403
        %v405 = vadd.f32 %v404, 1.0
        %v406 = vrcp.pop %v405
        %v407 = vmul.f32 1.0, %v406
        %v408 = vmul.f32 %v401, %v407
        %v409 = vld [vmem:[#allocation4] sm:$0xff]
        %v410 = vld [vmem:[#allocation4 + $0x8] sm:$0xff]
        %v411 = vld [vmem:[#allocation4 + $0x10] sm:$0xff]
        %v412 = vld [vmem:[#allocation4 + $0x18] sm:$0xff]
        %v413 = vld [vmem:[#allocation4 + $0x20] sm:$0xff]
        %v414 = vld [vmem:[#allocation4 + $0x28] sm:$0xff]
        %v415 = vld [vmem:[#allocation4 + $0x30] sm:$0xff]
        %v416 = vld [vmem:[#allocation4 + $0x38] sm:$0xff]
        %v417 = vld [vmem:[#allocation4 + $0x40] sm:$0xff]
        %v418 = vld [vmem:[#allocation4 + $0x48] sm:$0xff]
        %v419 = vld [vmem:[#allocation4 + $0x50] sm:$0xff]
        %v420 = vld [vmem:[#allocation4 + $0x58] sm:$0xff]
        %v421 = vld [vmem:[#allocation4 + $0x60] sm:$0xff]
        %v422 = vld [vmem:[#allocation4 + $0x68] sm:$0xff]
        %v423 = vld [vmem:[#allocation4 + $0x70] sm:$0xff]
        %v424 = vld [vmem:[#allocation4 + $0x78] sm:$0xff]
        %v425 = vld [vmem:[#allocation4 + $0x80] sm:$0xff]
        %v426 = vld [vmem:[#allocation4 + $0x88] sm:$0xff]
        %v427 = vld [vmem:[#allocation4 + $0x90] sm:$0xff]
        %v428 = vld [vmem:[#allocation4 + $0x98] sm:$0xff]
        %v429 = vld [vmem:[#allocation4 + $0xa0] sm:$0xff]
        %v430 = vld [vmem:[#allocation4 + $0xa8] sm:$0xff]
        %v431 = vld [vmem:[#allocation4 + $0xb0] sm:$0xff]
        %v432 = vld [vmem:[#allocation4 + $0xb8] sm:$0xff]
        %v433 = vld [vmem:[#allocation4 + $0xc0] sm:$0xff]
        %v434 = vld [vmem:[#allocation4 + $0xc8] sm:$0xff]
        %v435 = vld [vmem:[#allocation4 + $0xd0] sm:$0xff]
        %v436 = vld [vmem:[#allocation4 + $0xd8] sm:$0xff]
        %v437 = vld [vmem:[#allocation4 + $0xe0] sm:$0xff]
        %v438 = vld [vmem:[#allocation4 + $0xe8] sm:$0xff]
        %v439 = vld [vmem:[#allocation4 + $0xf0] sm:$0xff]
        %v440 = vld [vmem:[#allocation4 + $0xf8] sm:$0xff]
        %v441 = vld [vmem:[%s4] sm:$0x3]
        %v443 = vlaneseq
        %v444 = vshrl.u32 %v443, 7
        %v445 = vsub.s32 0, %v444
        %v446 = vrot.slane %v441, %v445
        %v447 = vlaneseq
        %v448 = vshrl.u32 %v447, 7
        %v449 = vsub.s32 1, %v448
        %v450 = vrot.slane %v441, %v449
        %453 = vmatprep.subr.mxu0 %v410
        %454 = vmatpush1.msra.mxu0 %v409
        %455 = vmatprep.subr.mxu0 %v412
        %456 = vmatpush1.msra.mxu0 %v411
        %457 = vmatprep.subr.mxu0 %v414
        %458 = vmatpush1.msra.mxu0 %v413
        %459 = vmatprep.subr.mxu0 %v416
        %460 = vmatpush1.msra.mxu0 %v415
        %461 = vmatprep.subr.mxu0 %v418
        %462 = vmatpush1.msra.mxu0 %v417
        %463 = vmatprep.subr.mxu0 %v420
        %464 = vmatpush1.msra.mxu0 %v419
        %465 = vmatprep.subr.mxu0 %v422
        %466 = vmatpush1.msra.mxu0 %v421
        %467 = vmatprep.subr.mxu0 %v424
        %468 = vmatpush1.msra.mxu0 %v423
        %469 = vmatprep.subr.mxu0 %v426
        %470 = vmatpush1.msra.mxu0 %v425
        %471 = vmatprep.subr.mxu0 %v428
        %472 = vmatpush1.msra.mxu0 %v427
        %473 = vmatprep.subr.mxu0 %v430
        %474 = vmatpush1.msra.mxu0 %v429
        %475 = vmatprep.subr.mxu0 %v432
        %476 = vmatpush1.msra.mxu0 %v431
        %477 = vmatprep.subr.mxu0 %v434
        %478 = vmatpush1.msra.mxu0 %v433
        %479 = vmatprep.subr.mxu0 %v436
        %480 = vmatpush1.msra.mxu0 %v435
        %481 = vmatprep.subr.mxu0 %v438
        %482 = vmatpush1.msra.mxu0 %v437
        %483 = vmatprep.subr.mxu0 %v440
        %484 = vmatpush1.msra.mxu0 %v439
        %485 = vmatprep.subr.mxu0 0.0
        %486 = vmatpush1.msra.mxu0 0.0
        %487 = vmatprep.subr.mxu0 0.0
        %488 = vmatpush1.msra.mxu0 0.0
        %489 = vmatprep.subr.mxu0 0.0
        %490 = vmatpush1.msra.mxu0 0.0
        %491 = vmatprep.subr.mxu0 0.0
        %492 = vmatpush1.msra.mxu0 0.0
        %493 = vmatprep.subr.mxu0 0.0
        %494 = vmatpush1.msra.mxu0 0.0
        %495 = vmatprep.subr.mxu0 0.0
        %496 = vmatpush1.msra.mxu0 0.0
        %497 = vmatprep.subr.mxu0 0.0
        %498 = vmatpush1.msra.mxu0 0.0
        %499 = vmatprep.subr.mxu0 0.0
        %500 = vmatpush1.msra.mxu0 0.0
        %501 = vmatprep.subr.mxu0 0.0
        %502 = vmatpush1.msra.mxu0 0.0
        %503 = vmatprep.subr.mxu0 0.0
        %504 = vmatpush1.msra.mxu0 0.0
        %505 = vmatprep.subr.mxu0 0.0
        %506 = vmatpush1.msra.mxu0 0.0
        %507 = vmatprep.subr.mxu0 0.0
        %508 = vmatpush1.msra.mxu0 0.0
        %509 = vmatprep.subr.mxu0 0.0
        %510 = vmatpush1.msra.mxu0 0.0
        %511 = vmatprep.subr.mxu0 0.0
        %512 = vmatpush1.msra.mxu0 0.0
        %513 = vmatprep.subr.mxu0 0.0
        %514 = vmatpush1.msra.mxu0 0.0
        %515 = vmatprep.subr.mxu0 0.0
        %516 = vmatpush1.msra.mxu0 0.0
        %517 = vmatprep.mubr.f32.mxu0 0.0
        %518 = vmatmul.mubr.f32.gmra.mrb[0].mxu0 %v408
        %v519 = vpop.f32.mrb[0].mxu0
        %v520 = vadd.f32 %v446, %v519
        %v521 = vpop.f32.mrb[0].mxu0
        %v522 = vadd.f32 %v450, %v521
        %523 = vdwg.mxu0
        %v524 = vtanh.pop %v520
        %v525 = vxor.u32 %v522, 2147483648
        %v526 = vmul.f32 %v525, 1.442695
        %v527 = vpow.pop %v526
        %v528 = vadd.f32 %v527, 1.0
        %v529 = vrcp.pop %v528
        %v530 = vmul.f32 1.0, %v529
        %v531 = vmul.f32 %v524, %v530
        %v532 = vld [vmem:[#allocation6] sm:$0xff]
        %v533 = vld [vmem:[#allocation6 + $0x8] sm:$0xff]
        %v534 = vld [vmem:[#allocation6 + $0x10] sm:$0xff]
        %v535 = vld [vmem:[#allocation6 + $0x18] sm:$0xff]
        %v536 = vld [vmem:[#allocation6 + $0x20] sm:$0xff]
        %v537 = vld [vmem:[#allocation6 + $0x28] sm:$0xff]
        %v538 = vld [vmem:[#allocation6 + $0x30] sm:$0xff]
        %v539 = vld [vmem:[#allocation6 + $0x38] sm:$0xff]
        %v540 = vld [vmem:[#allocation6 + $0x40] sm:$0xff]
        %v541 = vld [vmem:[#allocation6 + $0x48] sm:$0xff]
        %v542 = vld [vmem:[#allocation6 + $0x50] sm:$0xff]
        %v543 = vld [vmem:[#allocation6 + $0x58] sm:$0xff]
        %v544 = vld [vmem:[#allocation6 + $0x60] sm:$0xff]
        %v545 = vld [vmem:[#allocation6 + $0x68] sm:$0xff]
        %v546 = vld [vmem:[#allocation6 + $0x70] sm:$0xff]
        %v547 = vld [vmem:[#allocation6 + $0x78] sm:$0xff]
        %v548 = vld [vmem:[%s6] sm:$0x1]
        %549 = vmatprep.subr.mxu0 0.0
        %550 = vmatpush1.msra.mxu0 %v532
        %551 = vmatprep.subr.mxu0 0.0
        %552 = vmatpush1.msra.mxu0 %v533
        %553 = vmatprep.subr.mxu0 0.0
        %554 = vmatpush1.msra.mxu0 %v534
        %555 = vmatprep.subr.mxu0 0.0
        %556 = vmatpush1.msra.mxu0 %v535
        %557 = vmatprep.subr.mxu0 0.0
        %558 = vmatpush1.msra.mxu0 %v536
        %559 = vmatprep.subr.mxu0 0.0
        %560 = vmatpush1.msra.mxu0 %v537
        %561 = vmatprep.subr.mxu0 0.0
        %562 = vmatpush1.msra.mxu0 %v538
        %563 = vmatprep.subr.mxu0 0.0
        %564 = vmatpush1.msra.mxu0 %v539
        %565 = vmatprep.subr.mxu0 0.0
        %566 = vmatpush1.msra.mxu0 %v540
        %567 = vmatprep.subr.mxu0 0.0
        %568 = vmatpush1.msra.mxu0 %v541
        %569 = vmatprep.subr.mxu0 0.0
        %570 = vmatpush1.msra.mxu0 %v542
        %571 = vmatprep.subr.mxu0 0.0
        %572 = vmatpush1.msra.mxu0 %v543
        %573 = vmatprep.subr.mxu0 0.0
        %574 = vmatpush1.msra.mxu0 %v544
        %575 = vmatprep.subr.mxu0 0.0
        %576 = vmatpush1.msra.mxu0 %v545
        %577 = vmatprep.subr.mxu0 0.0
        %578 = vmatpush1.msra.mxu0 %v546
        %579 = vmatprep.subr.mxu0 0.0
        %580 = vmatpush1.msra.mxu0 %v547
        %581 = vmatprep.subr.mxu0 0.0
        %582 = vmatpush1.msra.mxu0 0.0
        %583 = vmatprep.subr.mxu0 0.0
        %584 = vmatpush1.msra.mxu0 0.0
        %585 = vmatprep.subr.mxu0 0.0
        %586 = vmatpush1.msra.mxu0 0.0
        %587 = vmatprep.subr.mxu0 0.0
        %588 = vmatpush1.msra.mxu0 0.0
        %589 = vmatprep.subr.mxu0 0.0
        %590 = vmatpush1.msra.mxu0 0.0
        %591 = vmatprep.subr.mxu0 0.0
        %592 = vmatpush1.msra.mxu0 0.0
        %593 = vmatprep.subr.mxu0 0.0
        %594 = vmatpush1.msra.mxu0 0.0
        %595 = vmatprep.subr.mxu0 0.0
        %596 = vmatpush1.msra.mxu0 0.0
        %597 = vmatprep.subr.mxu0 0.0
        %598 = vmatpush1.msra.mxu0 0.0
        %599 = vmatprep.subr.mxu0 0.0
        %600 = vmatpush1.msra.mxu0 0.0
        %601 = vmatprep.subr.mxu0 0.0
        %602 = vmatpush1.msra.mxu0 0.0
        %603 = vmatprep.subr.mxu0 0.0
        %604 = vmatpush1.msra.mxu0 0.0
        %605 = vmatprep.subr.mxu0 0.0
        %606 = vmatpush1.msra.mxu0 0.0
        %607 = vmatprep.subr.mxu0 0.0
        %608 = vmatpush1.msra.mxu0 0.0
        %609 = vmatprep.subr.mxu0 0.0
        %610 = vmatpush1.msra.mxu0 0.0
        %611 = vmatprep.subr.mxu0 0.0
        %612 = vmatpush1.msra.mxu0 0.0
        %613 = vmatprep.mubr.f32.mxu0 0.0
        %614 = vmatmul.mubr.f32.gmra.mrb[0].mxu0 %v531
        %v615 = vpop.f32.mrb[0].mxu0
        %v616 = vadd.f32 %v548, %v615
        %v617 = vpop.f32.mrb[0].mxu0
        %618 = vdwg.mxu0
        %619 = vst [vmem:[%s310] sm:$0x1] %v616
        %p620 = scmp.lt.s32.totalorder %s20, 1
        %s621 = scalar_select %p620, %s20, 1
        %s622 = scalar_lea.vmem %s7, %s621
        // Predicated region
        $region61: #{wavenet_decoder_forward.1} parent=47 // pred_check
          %p623 = pneg %p190
        $region62: #{wavenet_decoder_forward.1} parent=47 // pred_check_branch
          %625 = sbr.rel (%p623) target = $region64
        $region63: #{wavenet_decoder_forward.1} parent=47 // pred_region
          _
        $region64: #{wavenet_decoder_forward.1} parent=47 // pred_fallthru
          _
      $region48: #{wavenet_decoder_forward.1} parent=5 // pred_fallthru
        _
      %p626 = scmp.le.s32.totalorder 2, %s15
      // Predicated region
      $region65: #{wavenet_decoder_forward.1} parent=5 // pred_check
        %p627 = pneg %p626
      $region66: #{wavenet_decoder_forward.1} parent=5 // pred_check_branch
        %629 = sbr.rel (%p627) target = $region68
      $region67: #{wavenet_decoder_forward.1} parent=5 // pred_region
        %s630 = ssub.s32 %s15, 2
        // Predicated region
        $region69: #{wavenet_decoder_forward.1} parent=67 // pred_check
          %p631 = pneg %p196
        $region70: #{wavenet_decoder_forward.1} parent=67 // pred_check_branch
          %633 = sbr.rel (%p631) target = $region72
        $region71: #{wavenet_decoder_forward.1} parent=67 // pred_region
          %p634 = scmp.lt.s32.totalorder %s21, 1
          %s635 = scalar_select %p634, %s21, 1
          %s636 = scalar_lea.vmem %s7, %s635
        $region72: #{wavenet_decoder_forward.1} parent=67 // pred_fallthru
          _
      $region68: #{wavenet_decoder_forward.1} parent=5 // pred_fallthru
        _
    $region6: #{wavenet_decoder_forward.1} parent=1 // loop_footer
      %s19 = sadd.s32 1, %s15
    $region7: #{wavenet_decoder_forward.1} parent=1 // loop_footer_branch
      %14 = sbr.rel target = $region3
    $region8: #{wavenet_decoder_forward.1} parent=1 // loop_exit
      _
    %637 = vsyncpa [#allocation3], 1
    %s638 = scalar_lea.sflag [#allocation3], 1
    %639 = vsyncpa %s638, 1
    %640 = vsyncpa [#allocation5], 1

</llo_original>
